<compile_context>
chip_gen: v7x
topology: tpu7x:2x2x1
jax: 0.10.0
libtpu: 0.0.40
codegen_flags: <defaults>
</compile_context>

<pallas_src>
import functools

import jax
import jax.numpy as jnp
from jax.experimental import pallas as pl
from jax.experimental.pallas import tpu as pltpu


def _round_up(x, m):
    return (x + m - 1) // m * m


def _vmem_capacity_bytes():
    """Physical VMEM per core; conservative 64 MiB (v7x-sized) fallback."""
    try:
        info = pltpu.get_tpu_info()
        cap = getattr(info, "vmem_capacity_bytes", None)
        if cap:
            return int(cap)
    except Exception:
        pass
    return 64 * 1024 * 1024


def _post_level_attention_kernel(x_ref, w_ref, o_ref, *, out_feats):
    # Single fused MXU pass: x_tile @ blockdiag(Wp^T, Wc^T) -> [h_x | h_c].
    xw = jnp.dot(
        x_ref[...],
        w_ref[...],
        preferred_element_type=jnp.float32,
        precision=jax.lax.Precision.HIGHEST,
    )
    h_x = xw[:, :out_feats]
    h_c = xw[:, out_feats:]

    # Gating: sigmoid's exp runs on the EUP; fused combine saves a VPU mul.
    g = jax.nn.sigmoid(h_x + h_c)
    h = h_c + g * (h_x - h_c)

    if out_feats % 128 == 0:
        # Lane-aligned halves: two unmasked slice stores, no concat temp.
        o_ref[:, :out_feats] = h.astype(o_ref.dtype)
        o_ref[:, out_feats:] = h_x.astype(o_ref.dtype)
    else:
        # True-width (un-padded) output tile; single store of [h | h_x].
        o_ref[...] = jnp.concatenate([h, h_x], axis=-1).astype(o_ref.dtype)


def post_level_attention(x, w_post, w_claim):
    """PostLevelAttention forward.

    x:        (N, 2*in_feats)
    w_post:   (out_feats, in_feats)  -- PyTorch Linear weight of post_gate
    w_claim:  (out_feats, in_feats)  -- PyTorch Linear weight of claim_gate
    returns:  (N, 2*out_feats) == concat([g*h_x + (1-g)*h_c, h_x], -1)
    """
    n, two_in = x.shape
    in_feats = two_in // 2
    out_feats = w_post.shape[0]
    two_out = 2 * out_feats
    dtype = x.dtype
    itemsize = jnp.dtype(dtype).itemsize

    # Block-diagonal fused weight (2*in_feats, 2*out_feats); tiny and
    # VMEM-resident across the grid (constant index map).
    # TODO(synk): for in_feats/out_feats >= ~256, pass Wp^T / Wc^T as two
    # separate resident weights and do two dots on the lane-aligned halves of
    # x_ref -- the zero block of W_bd doubles MXU work, which only matters as
    # the op approaches compute-bound; irrelevant at small feature widths.
    w_bd = jnp.zeros((two_in, two_out), dtype=dtype)
    w_bd = w_bd.at[:in_feats, :out_feats].set(w_post.T.astype(dtype))
    w_bd = w_bd.at[in_feats:, out_feats:].set(w_claim.T.astype(dtype))
    w_bytes = two_in * two_out * itemsize

    # --- Row-tile selection: per-generation VMEM + step amortization -------
    vmem_cap = _vmem_capacity_bytes()
    # ~50 MiB on v7x (64 MiB phys), ~100 MiB on v5e/v6e (128 MiB phys);
    # leaves compiler-scratch headroom below the physical capacity.
    vmem_limit = max(32 << 20, min(int(vmem_cap * 0.78), vmem_cap - (8 << 20)))
    tile_budget = int(vmem_limit * 0.85)

    row_in = two_in * itemsize
    row_out = two_out * itemsize
    row_tmp = 4 * two_out * 4                      # in-kernel f32 intermediates
    per_row_vmem = 2 * row_in + 2 * row_out + row_tmp   # 2x = double buffering

    tm_vmem = max(8, (tile_budget - 2 * w_bytes) // per_row_vmem)
    # >= ~4 MiB of HBM traffic per grid step amortizes the ~0.35us step cost.
    tm_traffic = max(1024, (4 << 20) // max(row_in + row_out, 1))
    tm = int(min(tm_vmem, tm_traffic, 16384))
    # Never larger than the (8-aligned) row count; keep >= 8 grid steps for
    # v7x megacore sharding / pipelining once n is large enough to afford it.
    tm = min(tm, _round_up(n, 8))
    if n >= 8 * 1024:
        tm = min(tm, _round_up((n + 7) // 8, 8))
    tm = max(8, (tm // 8) * 8)

    grid = ((n + tm - 1) // tm,)   # ragged edge block masked by Pallas: no host pad

    cost = pl.CostEstimate(
        flops=2 * n * two_in * two_out,            # includes zero block (advisory)
        transcendentals=n * out_feats,
        bytes_accessed=n * row_in + w_bytes + n * row_out,
    )

    kernel = functools.partial(_post_level_attention_kernel, out_feats=out_feats)

    return pl.pallas_call(
        kernel,
        out_shape=jax.ShapeDtypeStruct((n, two_out), dtype),
        grid=grid,
        in_specs=[
            pl.BlockSpec((tm, two_in), lambda i: (i, 0)),       # row-blocked x
            pl.BlockSpec((two_in, two_out), lambda i: (0, 0)),  # resident weight
        ],
        out_specs=pl.BlockSpec((tm, two_out), lambda i: (i, 0)),
        compiler_params=pltpu.CompilerParams(
            dimension_semantics=("parallel",),
            vmem_limit_bytes=int(vmem_limit),
        ),
        cost_estimate=cost,
    )(x, w_bd)


def post_level_attention_ref(x, w_post, w_claim):
    half = x.shape[-1] // 2
    h_x = jnp.dot(x[:, :half], w_post.T, precision=jax.lax.Precision.HIGHEST)
    h_c = jnp.dot(x[:, half:], w_claim.T, precision=jax.lax.Precision.HIGHEST)
    g = jax.nn.sigmoid(h_x + h_c)
    h = g * h_x + (1.0 - g) * h_c
    return jnp.concatenate((h, h_x), axis=-1)


if __name__ == "__main__":
    in_feats = 32
    out_feats = 32
    batch = 8

    key = jax.random.PRNGKey(0)
    kx, kp, kc = jax.random.split(key, 3)

    # Deterministic synthetic inputs (PyTorch Linear weight shape: (out, in)).
    x = jax.random.normal(kx, (batch, 2 * in_feats), dtype=jnp.float32)
    w_post = jax.random.normal(kp, (out_feats, in_feats), dtype=jnp.float32) * 0.1
    w_claim = jax.random.normal(kc, (out_feats, in_feats), dtype=jnp.float32) * 0.1

    out = jax.block_until_ready(post_level_attention(x, w_post, w_claim))
    ref = post_level_attention_ref(x, w_post, w_claim)

    assert out.shape == (batch, 2 * out_feats), out.shape
    assert jnp.allclose(out, ref, atol=1e-5, rtol=1e-5), float(
        jnp.max(jnp.abs(out - ref)))

    print("KERNEL_OK")
</pallas_src>

<mosaic_0001>
module attributes {stable_mosaic.version = 11 : i64} {
  func.func @_post_level_attention_kernel(%arg0: i32, %arg1: memref<8x64xf32, #tpu.memory_space<vmem>>, %arg2: memref<64x64xf32, #tpu.memory_space<vmem>>, %arg3: memref<8x64xf32, #tpu.memory_space<vmem>>) attributes {dimension_semantics = [#tpu.dimension_semantics<parallel>], iteration_bounds = array<i64: 1>, scalar_prefetch = 0 : i64, scratch_operands = 0 : i64, tpu.core_type = #tpu.core_type<tc>, window_params = [{transform_indices = @transform_0, window_bounds = array<i64: 8, 64>}, {pipeline_mode = #tpu.pipeline_mode<synchronous>, transform_indices = @transform_1, window_bounds = array<i64: 64, 64>}, {transform_indices = @transform_2, window_bounds = array<i64: 8, 64>}]} {
    %c0 = arith.constant 0 : index
    %c0_0 = arith.constant 0 : index
    %0 = vector.load %arg1[%c0, %c0_0] : memref<8x64xf32, #tpu.memory_space<vmem>>, vector<8x64xf32>
    %c0_1 = arith.constant 0 : index
    %c0_2 = arith.constant 0 : index
    %1 = vector.load %arg2[%c0_1, %c0_2] : memref<64x64xf32, #tpu.memory_space<vmem>>, vector<64x64xf32>
    %cst = arith.constant dense<0.000000e+00> : vector<8x64xf32>
    %2 = tpu.matmul %0, %1, %cst {dimension_numbers = #tpu.dot_dimension_numbers<[1], [0], [0], [1], [0, 0, 1, 1], [], []>, precision = #tpu.contract_precision<fp32>} : vector<8x64xf32>, vector<64x64xf32>, vector<8x64xf32> -> vector<8x64xf32>
    %3 = vector.extract_strided_slice %2 {offsets = [0, 0], sizes = [8, 32], strides = [1, 1]} : vector<8x64xf32> to vector<8x32xf32>
    %4 = vector.extract_strided_slice %2 {offsets = [0, 32], sizes = [8, 32], strides = [1, 1]} : vector<8x64xf32> to vector<8x32xf32>
    %5 = arith.addf %3, %4 : vector<8x32xf32>
    %6 = arith.negf %5 : vector<8x32xf32>
    %7 = math.exp %6 : vector<8x32xf32>
    %cst_3 = arith.constant 1.000000e+00 : f32
    %8 = vector.broadcast %cst_3 : f32 to vector<8x32xf32>
    %9 = arith.addf %8, %7 : vector<8x32xf32>
    %10 = arith.divf %8, %9 : vector<8x32xf32>
    %11 = arith.subf %3, %4 : vector<8x32xf32>
    %12 = arith.mulf %10, %11 : vector<8x32xf32>
    %13 = arith.addf %4, %12 : vector<8x32xf32>
    %14 = tpu.concatenate %13, %3 in 1 : vector<8x32xf32>, vector<8x32xf32> -> vector<8x64xf32>
    %c0_4 = arith.constant 0 : index
    %c0_5 = arith.constant 0 : index
    %15 = vector.load %arg3[%c0_4, %c0_5] : memref<8x64xf32, #tpu.memory_space<vmem>>, vector<8x64xf32>
    tpu.vector_store %arg3[%c0_4, %c0_5], %14 {strides = array<i32>} : memref<8x64xf32, #tpu.memory_space<vmem>>, vector<8x64xf32>,
    return
  }
  func.func @transform_0(%arg0: i32) -> (i32, i32) {
    %c0_i32 = arith.constant 0 : i32
    %c0_i32_0 = arith.constant 0 : i32
    return %arg0, %c0_i32 : i32, i32
  }
  func.func @transform_1(%arg0: i32) -> (i32, i32) {
    %c0_i32 = arith.constant 0 : i32
    %c0_i32_0 = arith.constant 0 : i32
    %c0_i32_1 = arith.constant 0 : i32
    return %c0_i32, %c0_i32_0 : i32, i32
  }
  func.func @transform_2(%arg0: i32) -> (i32, i32) {
    %c0_i32 = arith.constant 0 : i32
    %c0_i32_0 = arith.constant 0 : i32
    return %arg0, %c0_i32 : i32, i32
  }
}

</mosaic_0001>

<llo_original>
// kernel: tpu_custom_call.1
$region0: #{tpu_custom_call.1}
  #allocation0 [shape = 'u32[]', space=smem, size = 0x4, offset = 0x4, fixed_abs, tag = 'smem constant byte address 0x4 - core index']
  #allocation1 [shape = 'u32[144,128]{1,0:T(1,128)}', space=vmem, size = 0x12000, scoped, tag = 'internal scratch']
  %s0 = inlined_call_operand.hbm [shape: f32[8,64], index: 0, kind: input, shape index: {}]
  %s1 = inlined_call_operand.hbm [shape: f32[64,64], index: 1, kind: input, shape index: {}]
  %s2 = inlined_call_operand.hbm [shape: f32[8,64], index: 2, kind: output, shape index: {}]
  %s3 = sld [smem:[#allocation0]]
  $region26: #{tpu_custom_call.1} parent=0
    _
  %s5 = ssub.s32 1, %s3
  %s6 = scalar_select 0, %s5, %s3
  $region1: #{tpu_custom_call.1} parent=0
    #allocation2 [shape = 'u8[4096]{0}', space=vmem, size = 0x1000, scoped, tag = 'input window, operand 0, single buffered']
    #allocation3 [shape = 's32[1]{0}', space=sflag, size = 0x4, scoped, tag = 'scoped memory for tpu_custom_call.1']
    #allocation4 [shape = 's32[1]{0}', space=sflag, size = 0x4, scoped, tag = 'scoped memory for tpu_custom_call.1']
    #allocation5 [shape = 'u8[32768]{0}', space=vmem, size = 0x8000, scoped, tag = 'input window, operand 1, single buffered']
    #allocation6 [shape = 's32[1]{0}', space=sflag, size = 0x4, scoped, tag = 'scoped memory for tpu_custom_call.1']
    #allocation7 [shape = 'u8[4096]{0}', space=vmem, size = 0x1000, scoped, tag = 'output window, operand 0, single buffered']
    %7 = vsyncpa [#allocation3], 0
    %8 = vsyncpa [#allocation6], 0
    %9 = vsyncpa [#allocation4], 0
    // Predicated region
    $region2: #{tpu_custom_call.1} parent=1 // pred_check
      _
    $region3: #{tpu_custom_call.1} parent=1 // pred_check_branch
      %11 = sbr.rel (0) target = $region5
    $region4: #{tpu_custom_call.1} parent=1 // pred_region
      %s13 = ssub.s32 128, 128
      %14 = vsyncadd [#allocation3], %s13
      %s16 = sshll.u32 [#allocation2], 4
      %s17 = int_to_ptr.vmem [resolvable:$true] %s16
      %19 = dma.hbm_to_vmem [thread:$0]  %s0, 128, %s17, [#allocation3]
    $region5: #{tpu_custom_call.1} parent=1 // pred_fallthru
      _
    // Predicated region
    $region6: #{tpu_custom_call.1} parent=1 // pred_check
      _
    $region7: #{tpu_custom_call.1} parent=1 // pred_check_branch
      %21 = sbr.rel (0) target = $region9
    $region8: #{tpu_custom_call.1} parent=1 // pred_region
      %s23 = ssub.s32 1024, 1024
      %24 = vsyncadd [#allocation6], %s23
      %s25 = sshll.u32 [#allocation5], 4
      %s26 = int_to_ptr.vmem [resolvable:$true] %s25
      %31 = dma.hbm_to_vmem [thread:$0]  %s1, 1024, %s26, [#allocation6], 128, 128, 8
    $region9: #{tpu_custom_call.1} parent=1 // pred_fallthru
      _
    // Predicated region
    $region10: #{tpu_custom_call.1} parent=1 // pred_check
      _
    $region11: #{tpu_custom_call.1} parent=1 // pred_check_branch
      %33 = sbr.rel (0) target = $region13
    $region12: #{tpu_custom_call.1} parent=1 // pred_region
      %34 = dma.done [#allocation3], 128
    $region13: #{tpu_custom_call.1} parent=1 // pred_fallthru
      _
    // Predicated region
    $region14: #{tpu_custom_call.1} parent=1 // pred_check
      _
    $region15: #{tpu_custom_call.1} parent=1 // pred_check_branch
      %36 = sbr.rel (0) target = $region17
    $region16: #{tpu_custom_call.1} parent=1 // pred_region
      %37 = dma.done [#allocation6], 1024
    $region17: #{tpu_custom_call.1} parent=1 // pred_fallthru
      _
    %v38 = vld [vmem:[#allocation2] sm:$0xff]
    %v39 = vld [vmem:[#allocation5] sm:$0xff]
    %v40 = vld [vmem:[#allocation5 + $0x8] sm:$0xff]
    %v41 = vld [vmem:[#allocation5 + $0x10] sm:$0xff]
    %v42 = vld [vmem:[#allocation5 + $0x18] sm:$0xff]
    %v43 = vld [vmem:[#allocation5 + $0x20] sm:$0xff]
    %v44 = vld [vmem:[#allocation5 + $0x28] sm:$0xff]
    %v45 = vld [vmem:[#allocation5 + $0x30] sm:$0xff]
    %v46 = vld [vmem:[#allocation5 + $0x38] sm:$0xff]
    %vm47 = vcmask 523264
    %v49 = vsel %vm47, %v38, 0
    %51 = vmatprep.subr.mxu0 0.0
    %v52 = vand.u32 %v39, 4294901760
    %53 = vmatpush1.msra.mxu0 %v52
    %54 = vmatprep.subr.mxu0 0.0
    %v55 = vand.u32 %v40, 4294901760
    %56 = vmatpush1.msra.mxu0 %v55
    %57 = vmatprep.subr.mxu0 0.0
    %v58 = vand.u32 %v41, 4294901760
    %59 = vmatpush1.msra.mxu0 %v58
    %60 = vmatprep.subr.mxu0 0.0
    %v61 = vand.u32 %v42, 4294901760
    %62 = vmatpush1.msra.mxu0 %v61
    %63 = vmatprep.subr.mxu0 0.0
    %v64 = vand.u32 %v43, 4294901760
    %65 = vmatpush1.msra.mxu0 %v64
    %66 = vmatprep.subr.mxu0 0.0
    %v67 = vand.u32 %v44, 4294901760
    %68 = vmatpush1.msra.mxu0 %v67
    %69 = vmatprep.subr.mxu0 0.0
    %v70 = vand.u32 %v45, 4294901760
    %71 = vmatpush1.msra.mxu0 %v70
    %72 = vmatprep.subr.mxu0 0.0
    %v73 = vand.u32 %v46, 4294901760
    %74 = vmatpush1.msra.mxu0 %v73
    %75 = vmatprep.subr.mxu0 0.0
    %76 = vmatpush1.msra.mxu0 0.0
    %77 = vmatprep.subr.mxu0 0.0
    %78 = vmatpush1.msra.mxu0 0.0
    %79 = vmatprep.subr.mxu0 0.0
    %80 = vmatpush1.msra.mxu0 0.0
    %81 = vmatprep.subr.mxu0 0.0
    %82 = vmatpush1.msra.mxu0 0.0
    %83 = vmatprep.subr.mxu0 0.0
    %84 = vmatpush1.msra.mxu0 0.0
    %85 = vmatprep.subr.mxu0 0.0
    %86 = vmatpush1.msra.mxu0 0.0
    %87 = vmatprep.subr.mxu0 0.0
    %88 = vmatpush1.msra.mxu0 0.0
    %89 = vmatprep.subr.mxu0 0.0
    %90 = vmatpush1.msra.mxu0 0.0
    %91 = vmatprep.subr.mxu0 0.0
    %92 = vmatpush1.msra.mxu0 0.0
    %93 = vmatprep.subr.mxu0 0.0
    %94 = vmatpush1.msra.mxu0 0.0
    %95 = vmatprep.subr.mxu0 0.0
    %96 = vmatpush1.msra.mxu0 0.0
    %97 = vmatprep.subr.mxu0 0.0
    %98 = vmatpush1.msra.mxu0 0.0
    %99 = vmatprep.subr.mxu0 0.0
    %100 = vmatpush1.msra.mxu0 0.0
    %101 = vmatprep.subr.mxu0 0.0
    %102 = vmatpush1.msra.mxu0 0.0
    %103 = vmatprep.subr.mxu0 0.0
    %104 = vmatpush1.msra.mxu0 0.0
    %105 = vmatprep.subr.mxu0 0.0
    %106 = vmatpush1.msra.mxu0 0.0
    %107 = vmatprep.subr.mxu0 0.0
    %108 = vmatpush1.msra.mxu0 0.0
    %109 = vmatprep.subr.mxu0 0.0
    %110 = vmatpush1.msra.mxu0 0.0
    %111 = vmatprep.subr.mxu0 0.0
    %112 = vmatpush1.msra.mxu0 0.0
    %113 = vmatprep.subr.mxu0 0.0
    %114 = vmatpush1.msra.mxu0 0.0
    %115 = vmatprep.subr.mxu0 0.0
    %116 = vmatpush1.msra.mxu0 0.0
    %117 = vmatprep.subr.mxu0 0.0
    %118 = vmatpush1.msra.mxu0 0.0
    %119 = vmatprep.subr.mxu0 0.0
    %120 = vmatpush1.msra.mxu0 0.0
    %121 = vmatprep.subr.mxu0 0.0
    %122 = vmatpush1.msra.mxu0 0.0
    %123 = vmatprep.mubr.f32.mxu0 0.0
    %v124 = vand.u32 %v49, 4294901760
    %v125 = vsub.f32 %v49, %v124
    %v126 = vand.u32 %v125, 4294901760
    %v127 = vsub.f32 %v125, %v126
    %v128 = vand.u32 %v127, 4294901760
    %129 = vmatmul.mubr.f32.gmra.mrb[0].mxu0 %v128
    %v130 = vpop.f32.mrb[0].mxu0
    %v131 = vadd.f32 0.0, %v130
    %v132 = vpop.f32.mrb[0].mxu0
    %133 = vdwg.mxu0
    %134 = vmatprep.subr.mxu0 0.0
    %v135 = vand.u32 %v39, 4294901760
    %v136 = vsub.f32 %v39, %v135
    %v137 = vand.u32 %v136, 4294901760
    %v138 = vsub.f32 %v136, %v137
    %v139 = vand.u32 %v138, 4294901760
    %140 = vmatpush1.msra.mxu0 %v139
    %141 = vmatprep.subr.mxu0 0.0
    %v142 = vand.u32 %v40, 4294901760
    %v143 = vsub.f32 %v40, %v142
    %v144 = vand.u32 %v143, 4294901760
    %v145 = vsub.f32 %v143, %v144
    %v146 = vand.u32 %v145, 4294901760
    %147 = vmatpush1.msra.mxu0 %v146
    %148 = vmatprep.subr.mxu0 0.0
    %v149 = vand.u32 %v41, 4294901760
    %v150 = vsub.f32 %v41, %v149
    %v151 = vand.u32 %v150, 4294901760
    %v152 = vsub.f32 %v150, %v151
    %v153 = vand.u32 %v152, 4294901760
    %154 = vmatpush1.msra.mxu0 %v153
    %155 = vmatprep.subr.mxu0 0.0
    %v156 = vand.u32 %v42, 4294901760
    %v157 = vsub.f32 %v42, %v156
    %v158 = vand.u32 %v157, 4294901760
    %v159 = vsub.f32 %v157, %v158
    %v160 = vand.u32 %v159, 4294901760
    %161 = vmatpush1.msra.mxu0 %v160
    %162 = vmatprep.subr.mxu0 0.0
    %v163 = vand.u32 %v43, 4294901760
    %v164 = vsub.f32 %v43, %v163
    %v165 = vand.u32 %v164, 4294901760
    %v166 = vsub.f32 %v164, %v165
    %v167 = vand.u32 %v166, 4294901760
    %168 = vmatpush1.msra.mxu0 %v167
    %169 = vmatprep.subr.mxu0 0.0
    %v170 = vand.u32 %v44, 4294901760
    %v171 = vsub.f32 %v44, %v170
    %v172 = vand.u32 %v171, 4294901760
    %v173 = vsub.f32 %v171, %v172
    %v174 = vand.u32 %v173, 4294901760
    %175 = vmatpush1.msra.mxu0 %v174
    %176 = vmatprep.subr.mxu0 0.0
    %v177 = vand.u32 %v45, 4294901760
    %v178 = vsub.f32 %v45, %v177
    %v179 = vand.u32 %v178, 4294901760
    %v180 = vsub.f32 %v178, %v179
    %v181 = vand.u32 %v180, 4294901760
    %182 = vmatpush1.msra.mxu0 %v181
    %183 = vmatprep.subr.mxu0 0.0
    %v184 = vand.u32 %v46, 4294901760
    %v185 = vsub.f32 %v46, %v184
    %v186 = vand.u32 %v185, 4294901760
    %v187 = vsub.f32 %v185, %v186
    %v188 = vand.u32 %v187, 4294901760
    %189 = vmatpush1.msra.mxu0 %v188
    %190 = vmatprep.subr.mxu0 0.0
    %191 = vmatpush1.msra.mxu0 0.0
    %192 = vmatprep.subr.mxu0 0.0
    %193 = vmatpush1.msra.mxu0 0.0
    %194 = vmatprep.subr.mxu0 0.0
    %195 = vmatpush1.msra.mxu0 0.0
    %196 = vmatprep.subr.mxu0 0.0
    %197 = vmatpush1.msra.mxu0 0.0
    %198 = vmatprep.subr.mxu0 0.0
    %199 = vmatpush1.msra.mxu0 0.0
    %200 = vmatprep.subr.mxu0 0.0
    %201 = vmatpush1.msra.mxu0 0.0
    %202 = vmatprep.subr.mxu0 0.0
    %203 = vmatpush1.msra.mxu0 0.0
    %204 = vmatprep.subr.mxu0 0.0
    %205 = vmatpush1.msra.mxu0 0.0
    %206 = vmatprep.subr.mxu0 0.0
    %207 = vmatpush1.msra.mxu0 0.0
    %208 = vmatprep.subr.mxu0 0.0
    %209 = vmatpush1.msra.mxu0 0.0
    %210 = vmatprep.subr.mxu0 0.0
    %211 = vmatpush1.msra.mxu0 0.0
    %212 = vmatprep.subr.mxu0 0.0
    %213 = vmatpush1.msra.mxu0 0.0
    %214 = vmatprep.subr.mxu0 0.0
    %215 = vmatpush1.msra.mxu0 0.0
    %216 = vmatprep.subr.mxu0 0.0
    %217 = vmatpush1.msra.mxu0 0.0
    %218 = vmatprep.subr.mxu0 0.0
    %219 = vmatpush1.msra.mxu0 0.0
    %220 = vmatprep.subr.mxu0 0.0
    %221 = vmatpush1.msra.mxu0 0.0
    %222 = vmatprep.subr.mxu0 0.0
    %223 = vmatpush1.msra.mxu0 0.0
    %224 = vmatprep.subr.mxu0 0.0
    %225 = vmatpush1.msra.mxu0 0.0
    %226 = vmatprep.subr.mxu0 0.0
    %227 = vmatpush1.msra.mxu0 0.0
    %228 = vmatprep.subr.mxu0 0.0
    %229 = vmatpush1.msra.mxu0 0.0
    %230 = vmatprep.subr.mxu0 0.0
    %231 = vmatpush1.msra.mxu0 0.0
    %232 = vmatprep.subr.mxu0 0.0
    %233 = vmatpush1.msra.mxu0 0.0
    %234 = vmatprep.subr.mxu0 0.0
    %235 = vmatpush1.msra.mxu0 0.0
    %236 = vmatprep.subr.mxu0 0.0
    %237 = vmatpush1.msra.mxu0 0.0
    %238 = vmatprep.mubr.f32.mxu0 0.0
    %v239 = vand.u32 %v49, 4294901760
    %240 = vmatmul.mubr.f32.gmra.mrb[0].mxu0 %v239
    %v241 = vpop.f32.mrb[0].mxu0
    %v242 = vadd.f32 %v131, %v241
    %v243 = vpop.f32.mrb[0].mxu0
    %244 = vdwg.mxu0
    %245 = vmatprep.subr.mxu0 0.0
    %v246 = vand.u32 %v39, 4294901760
    %v247 = vsub.f32 %v39, %v246
    %248 = vmatpush1.msra.mxu0 %v247
    %249 = vmatprep.subr.mxu0 0.0
    %v250 = vand.u32 %v40, 4294901760
    %v251 = vsub.f32 %v40, %v250
    %252 = vmatpush1.msra.mxu0 %v251
    %253 = vmatprep.subr.mxu0 0.0
    %v254 = vand.u32 %v41, 4294901760
    %v255 = vsub.f32 %v41, %v254
    %256 = vmatpush1.msra.mxu0 %v255
    %257 = vmatprep.subr.mxu0 0.0
    %v258 = vand.u32 %v42, 4294901760
    %v259 = vsub.f32 %v42, %v258
    %260 = vmatpush1.msra.mxu0 %v259
    %261 = vmatprep.subr.mxu0 0.0
    %v262 = vand.u32 %v43, 4294901760
    %v263 = vsub.f32 %v43, %v262
    %264 = vmatpush1.msra.mxu0 %v263
    %265 = vmatprep.subr.mxu0 0.0
    %v266 = vand.u32 %v44, 4294901760
    %v267 = vsub.f32 %v44, %v266
    %268 = vmatpush1.msra.mxu0 %v267
    %269 = vmatprep.subr.mxu0 0.0
    %v270 = vand.u32 %v45, 4294901760
    %v271 = vsub.f32 %v45, %v270
    %272 = vmatpush1.msra.mxu0 %v271
    %273 = vmatprep.subr.mxu0 0.0
    %v274 = vand.u32 %v46, 4294901760
    %v275 = vsub.f32 %v46, %v274
    %276 = vmatpush1.msra.mxu0 %v275
    %277 = vmatprep.subr.mxu0 0.0
    %278 = vmatpush1.msra.mxu0 0.0
    %279 = vmatprep.subr.mxu0 0.0
    %280 = vmatpush1.msra.mxu0 0.0
    %281 = vmatprep.subr.mxu0 0.0
    %282 = vmatpush1.msra.mxu0 0.0
    %283 = vmatprep.subr.mxu0 0.0
    %284 = vmatpush1.msra.mxu0 0.0
    %285 = vmatprep.subr.mxu0 0.0
    %286 = vmatpush1.msra.mxu0 0.0
    %287 = vmatprep.subr.mxu0 0.0
    %288 = vmatpush1.msra.mxu0 0.0
    %289 = vmatprep.subr.mxu0 0.0
    %290 = vmatpush1.msra.mxu0 0.0
    %291 = vmatprep.subr.mxu0 0.0
    %292 = vmatpush1.msra.mxu0 0.0
    %293 = vmatprep.subr.mxu0 0.0
    %294 = vmatpush1.msra.mxu0 0.0
    %295 = vmatprep.subr.mxu0 0.0
    %296 = vmatpush1.msra.mxu0 0.0
    %297 = vmatprep.subr.mxu0 0.0
    %298 = vmatpush1.msra.mxu0 0.0
    %299 = vmatprep.subr.mxu0 0.0
    %300 = vmatpush1.msra.mxu0 0.0
    %301 = vmatprep.subr.mxu0 0.0
    %302 = vmatpush1.msra.mxu0 0.0
    %303 = vmatprep.subr.mxu0 0.0
    %304 = vmatpush1.msra.mxu0 0.0
    %305 = vmatprep.subr.mxu0 0.0
    %306 = vmatpush1.msra.mxu0 0.0
    %307 = vmatprep.subr.mxu0 0.0
    %308 = vmatpush1.msra.mxu0 0.0
    %309 = vmatprep.subr.mxu0 0.0
    %310 = vmatpush1.msra.mxu0 0.0
    %311 = vmatprep.subr.mxu0 0.0
    %312 = vmatpush1.msra.mxu0 0.0
    %313 = vmatprep.subr.mxu0 0.0
    %314 = vmatpush1.msra.mxu0 0.0
    %315 = vmatprep.subr.mxu0 0.0
    %316 = vmatpush1.msra.mxu0 0.0
    %317 = vmatprep.subr.mxu0 0.0
    %318 = vmatpush1.msra.mxu0 0.0
    %319 = vmatprep.subr.mxu0 0.0
    %320 = vmatpush1.msra.mxu0 0.0
    %321 = vmatprep.subr.mxu0 0.0
    %322 = vmatpush1.msra.mxu0 0.0
    %323 = vmatprep.subr.mxu0 0.0
    %324 = vmatpush1.msra.mxu0 0.0
    %325 = vmatprep.mubr.f32.mxu0 0.0
    %v326 = vand.u32 %v49, 4294901760
    %v327 = vsub.f32 %v49, %v326
    %328 = vmatmul.mubr.f32.gmra.mrb[0].mxu0 %v327
    %v329 = vpop.f32.mrb[0].mxu0
    %v330 = vadd.f32 %v242, %v329
    %v331 = vpop.f32.mrb[0].mxu0
    %332 = vdwg.mxu0
    %333 = vmatprep.subr.mxu0 0.0
    %v334 = vand.u32 %v39, 4294901760
    %335 = vmatpush1.msra.mxu0 %v334
    %336 = vmatprep.subr.mxu0 0.0
    %v337 = vand.u32 %v40, 4294901760
    %338 = vmatpush1.msra.mxu0 %v337
    %339 = vmatprep.subr.mxu0 0.0
    %v340 = vand.u32 %v41, 4294901760
    %341 = vmatpush1.msra.mxu0 %v340
    %342 = vmatprep.subr.mxu0 0.0
    %v343 = vand.u32 %v42, 4294901760
    %344 = vmatpush1.msra.mxu0 %v343
    %345 = vmatprep.subr.mxu0 0.0
    %v346 = vand.u32 %v43, 4294901760
    %347 = vmatpush1.msra.mxu0 %v346
    %348 = vmatprep.subr.mxu0 0.0
    %v349 = vand.u32 %v44, 4294901760
    %350 = vmatpush1.msra.mxu0 %v349
    %351 = vmatprep.subr.mxu0 0.0
    %v352 = vand.u32 %v45, 4294901760
    %353 = vmatpush1.msra.mxu0 %v352
    %354 = vmatprep.subr.mxu0 0.0
    %v355 = vand.u32 %v46, 4294901760
    %356 = vmatpush1.msra.mxu0 %v355
    %357 = vmatprep.subr.mxu0 0.0
    %358 = vmatpush1.msra.mxu0 0.0
    %359 = vmatprep.subr.mxu0 0.0
    %360 = vmatpush1.msra.mxu0 0.0
    %361 = vmatprep.subr.mxu0 0.0
    %362 = vmatpush1.msra.mxu0 0.0
    %363 = vmatprep.subr.mxu0 0.0
    %364 = vmatpush1.msra.mxu0 0.0
    %365 = vmatprep.subr.mxu0 0.0
    %366 = vmatpush1.msra.mxu0 0.0
    %367 = vmatprep.subr.mxu0 0.0
    %368 = vmatpush1.msra.mxu0 0.0
    %369 = vmatprep.subr.mxu0 0.0
    %370 = vmatpush1.msra.mxu0 0.0
    %371 = vmatprep.subr.mxu0 0.0
    %372 = vmatpush1.msra.mxu0 0.0
    %373 = vmatprep.subr.mxu0 0.0
    %374 = vmatpush1.msra.mxu0 0.0
    %375 = vmatprep.subr.mxu0 0.0
    %376 = vmatpush1.msra.mxu0 0.0
    %377 = vmatprep.subr.mxu0 0.0
    %378 = vmatpush1.msra.mxu0 0.0
    %379 = vmatprep.subr.mxu0 0.0
    %380 = vmatpush1.msra.mxu0 0.0
    %381 = vmatprep.subr.mxu0 0.0
    %382 = vmatpush1.msra.mxu0 0.0
    %383 = vmatprep.subr.mxu0 0.0
    %384 = vmatpush1.msra.mxu0 0.0
    %385 = vmatprep.subr.mxu0 0.0
    %386 = vmatpush1.msra.mxu0 0.0
    %387 = vmatprep.subr.mxu0 0.0
    %388 = vmatpush1.msra.mxu0 0.0
    %389 = vmatprep.subr.mxu0 0.0
    %390 = vmatpush1.msra.mxu0 0.0
    %391 = vmatprep.subr.mxu0 0.0
    %392 = vmatpush1.msra.mxu0 0.0
    %393 = vmatprep.subr.mxu0 0.0
    %394 = vmatpush1.msra.mxu0 0.0
    %395 = vmatprep.subr.mxu0 0.0
    %396 = vmatpush1.msra.mxu0 0.0
    %397 = vmatprep.subr.mxu0 0.0
    %398 = vmatpush1.msra.mxu0 0.0
    %399 = vmatprep.subr.mxu0 0.0
    %400 = vmatpush1.msra.mxu0 0.0
    %401 = vmatprep.subr.mxu0 0.0
    %402 = vmatpush1.msra.mxu0 0.0
    %403 = vmatprep.subr.mxu0 0.0
    %404 = vmatpush1.msra.mxu0 0.0
    %405 = vmatprep.mubr.f32.mxu0 0.0
    %v406 = vand.u32 %v49, 4294901760
    %v407 = vsub.f32 %v49, %v406
    %v408 = vand.u32 %v407, 4294901760
    %409 = vmatmul.mubr.f32.gmra.mrb[0].mxu0 %v408
    %v410 = vpop.f32.mrb[0].mxu0
    %v411 = vadd.f32 %v330, %v410
    %v412 = vpop.f32.mrb[0].mxu0
    %413 = vdwg.mxu0
    %414 = vmatprep.subr.mxu0 0.0
    %v415 = vand.u32 %v39, 4294901760
    %v416 = vsub.f32 %v39, %v415
    %v417 = vand.u32 %v416, 4294901760
    %418 = vmatpush1.msra.mxu0 %v417
    %419 = vmatprep.subr.mxu0 0.0
    %v420 = vand.u32 %v40, 4294901760
    %v421 = vsub.f32 %v40, %v420
    %v422 = vand.u32 %v421, 4294901760
    %423 = vmatpush1.msra.mxu0 %v422
    %424 = vmatprep.subr.mxu0 0.0
    %v425 = vand.u32 %v41, 4294901760
    %v426 = vsub.f32 %v41, %v425
    %v427 = vand.u32 %v426, 4294901760
    %428 = vmatpush1.msra.mxu0 %v427
    %429 = vmatprep.subr.mxu0 0.0
    %v430 = vand.u32 %v42, 4294901760
    %v431 = vsub.f32 %v42, %v430
    %v432 = vand.u32 %v431, 4294901760
    %433 = vmatpush1.msra.mxu0 %v432
    %434 = vmatprep.subr.mxu0 0.0
    %v435 = vand.u32 %v43, 4294901760
    %v436 = vsub.f32 %v43, %v435
    %v437 = vand.u32 %v436, 4294901760
    %438 = vmatpush1.msra.mxu0 %v437
    %439 = vmatprep.subr.mxu0 0.0
    %v440 = vand.u32 %v44, 4294901760
    %v441 = vsub.f32 %v44, %v440
    %v442 = vand.u32 %v441, 4294901760
    %443 = vmatpush1.msra.mxu0 %v442
    %444 = vmatprep.subr.mxu0 0.0
    %v445 = vand.u32 %v45, 4294901760
    %v446 = vsub.f32 %v45, %v445
    %v447 = vand.u32 %v446, 4294901760
    %448 = vmatpush1.msra.mxu0 %v447
    %449 = vmatprep.subr.mxu0 0.0
    %v450 = vand.u32 %v46, 4294901760
    %v451 = vsub.f32 %v46, %v450
    %v452 = vand.u32 %v451, 4294901760
    %453 = vmatpush1.msra.mxu0 %v452
    %454 = vmatprep.subr.mxu0 0.0
    %455 = vmatpush1.msra.mxu0 0.0
    %456 = vmatprep.subr.mxu0 0.0
    %457 = vmatpush1.msra.mxu0 0.0
    %458 = vmatprep.subr.mxu0 0.0
    %459 = vmatpush1.msra.mxu0 0.0
    %460 = vmatprep.subr.mxu0 0.0
    %461 = vmatpush1.msra.mxu0 0.0
    %462 = vmatprep.subr.mxu0 0.0
    %463 = vmatpush1.msra.mxu0 0.0
    %464 = vmatprep.subr.mxu0 0.0
    %465 = vmatpush1.msra.mxu0 0.0
    %466 = vmatprep.subr.mxu0 0.0
    %467 = vmatpush1.msra.mxu0 0.0
    %468 = vmatprep.subr.mxu0 0.0
    %469 = vmatpush1.msra.mxu0 0.0
    %470 = vmatprep.subr.mxu0 0.0
    %471 = vmatpush1.msra.mxu0 0.0
    %472 = vmatprep.subr.mxu0 0.0
    %473 = vmatpush1.msra.mxu0 0.0
    %474 = vmatprep.subr.mxu0 0.0
    %475 = vmatpush1.msra.mxu0 0.0
    %476 = vmatprep.subr.mxu0 0.0
    %477 = vmatpush1.msra.mxu0 0.0
    %478 = vmatprep.subr.mxu0 0.0
    %479 = vmatpush1.msra.mxu0 0.0
    %480 = vmatprep.subr.mxu0 0.0
    %481 = vmatpush1.msra.mxu0 0.0
    %482 = vmatprep.subr.mxu0 0.0
    %483 = vmatpush1.msra.mxu0 0.0
    %484 = vmatprep.subr.mxu0 0.0
    %485 = vmatpush1.msra.mxu0 0.0
    %486 = vmatprep.subr.mxu0 0.0
    %487 = vmatpush1.msra.mxu0 0.0
    %488 = vmatprep.subr.mxu0 0.0
    %489 = vmatpush1.msra.mxu0 0.0
    %490 = vmatprep.subr.mxu0 0.0
    %491 = vmatpush1.msra.mxu0 0.0
    %492 = vmatprep.subr.mxu0 0.0
    %493 = vmatpush1.msra.mxu0 0.0
    %494 = vmatprep.subr.mxu0 0.0
    %495 = vmatpush1.msra.mxu0 0.0
    %496 = vmatprep.subr.mxu0 0.0
    %497 = vmatpush1.msra.mxu0 0.0
    %498 = vmatprep.subr.mxu0 0.0
    %499 = vmatpush1.msra.mxu0 0.0
    %500 = vmatprep.subr.mxu0 0.0
    %501 = vmatpush1.msra.mxu0 0.0
    %502 = vmatprep.mubr.f32.mxu0 0.0
    %v503 = vand.u32 %v49, 4294901760
    %504 = vmatmul.mubr.f32.gmra.mrb[0].mxu0 %v503
    %v505 = vpop.f32.mrb[0].mxu0
    %v506 = vadd.f32 %v411, %v505
    %v507 = vpop.f32.mrb[0].mxu0
    %508 = vdwg.mxu0
    %509 = vmatprep.subr.mxu0 0.0
    %v510 = vand.u32 %v39, 4294901760
    %511 = vmatpush1.msra.mxu0 %v510
    %512 = vmatprep.subr.mxu0 0.0
    %v513 = vand.u32 %v40, 4294901760
    %514 = vmatpush1.msra.mxu0 %v513
    %515 = vmatprep.subr.mxu0 0.0
    %v516 = vand.u32 %v41, 4294901760
    %517 = vmatpush1.msra.mxu0 %v516
    %518 = vmatprep.subr.mxu0 0.0
    %v519 = vand.u32 %v42, 4294901760
    %520 = vmatpush1.msra.mxu0 %v519
    %521 = vmatprep.subr.mxu0 0.0
    %v522 = vand.u32 %v43, 4294901760
    %523 = vmatpush1.msra.mxu0 %v522
    %524 = vmatprep.subr.mxu0 0.0
    %v525 = vand.u32 %v44, 4294901760
    %526 = vmatpush1.msra.mxu0 %v525
    %527 = vmatprep.subr.mxu0 0.0
    %v528 = vand.u32 %v45, 4294901760
    %529 = vmatpush1.msra.mxu0 %v528
    %530 = vmatprep.subr.mxu0 0.0
    %v531 = vand.u32 %v46, 4294901760
    %532 = vmatpush1.msra.mxu0 %v531
    %533 = vmatprep.subr.mxu0 0.0
    %534 = vmatpush1.msra.mxu0 0.0
    %535 = vmatprep.subr.mxu0 0.0
    %536 = vmatpush1.msra.mxu0 0.0
    %537 = vmatprep.subr.mxu0 0.0
    %538 = vmatpush1.msra.mxu0 0.0
    %539 = vmatprep.subr.mxu0 0.0
    %540 = vmatpush1.msra.mxu0 0.0
    %541 = vmatprep.subr.mxu0 0.0
    %542 = vmatpush1.msra.mxu0 0.0
    %543 = vmatprep.subr.mxu0 0.0
    %544 = vmatpush1.msra.mxu0 0.0
    %545 = vmatprep.subr.mxu0 0.0
    %546 = vmatpush1.msra.mxu0 0.0
    %547 = vmatprep.subr.mxu0 0.0
    %548 = vmatpush1.msra.mxu0 0.0
    %549 = vmatprep.subr.mxu0 0.0
    %550 = vmatpush1.msra.mxu0 0.0
    %551 = vmatprep.subr.mxu0 0.0
    %552 = vmatpush1.msra.mxu0 0.0
    %553 = vmatprep.subr.mxu0 0.0
    %554 = vmatpush1.msra.mxu0 0.0
    %555 = vmatprep.subr.mxu0 0.0
    %556 = vmatpush1.msra.mxu0 0.0
    %557 = vmatprep.subr.mxu0 0.0
    %558 = vmatpush1.msra.mxu0 0.0
    %559 = vmatprep.subr.mxu0 0.0
    %560 = vmatpush1.msra.mxu0 0.0
    %561 = vmatprep.subr.mxu0 0.0
    %562 = vmatpush1.msra.mxu0 0.0
    %563 = vmatprep.subr.mxu0 0.0
    %564 = vmatpush1.msra.mxu0 0.0
    %565 = vmatprep.subr.mxu0 0.0
    %566 = vmatpush1.msra.mxu0 0.0
    %567 = vmatprep.subr.mxu0 0.0
    %568 = vmatpush1.msra.mxu0 0.0
    %569 = vmatprep.subr.mxu0 0.0
    %570 = vmatpush1.msra.mxu0 0.0
    %571 = vmatprep.subr.mxu0 0.0
    %572 = vmatpush1.msra.mxu0 0.0
    %573 = vmatprep.subr.mxu0 0.0
    %574 = vmatpush1.msra.mxu0 0.0
    %575 = vmatprep.subr.mxu0 0.0
    %576 = vmatpush1.msra.mxu0 0.0
    %577 = vmatprep.subr.mxu0 0.0
    %578 = vmatpush1.msra.mxu0 0.0
    %579 = vmatprep.subr.mxu0 0.0
    %580 = vmatpush1.msra.mxu0 0.0
    %581 = vmatprep.mubr.f32.mxu0 0.0
    %v582 = vand.u32 %v49, 4294901760
    %583 = vmatmul.mubr.f32.gmra.mrb[0].mxu0 %v582
    %v584 = vpop.f32.mrb[0].mxu0
    %v585 = vadd.f32 %v506, %v584
    %v586 = vpop.f32.mrb[0].mxu0
    %587 = vdwg.mxu0
    %589 = vrot.lane.b32.xlu0 %v585, 96
    %v590 = vpop.permute.xlu0 %589
    %v592 = vadd.f32 %v585, %v590
    %v593 = vxor.u32 %v592, 2147483648
    %v594 = vmul.f32 %v593, 1.442695
    %v595 = vpow.pop %v594
    %v596 = vadd.f32 %v595, 1.0
    %v597 = vrcp.pop %v596
    %v598 = vmul.f32 1.0, %v597
    %v599 = vsub.f32 %v585, %v590
    %v600 = vmul.f32 %v598, %v599
    %602 = vrot.lane.b32.xlu0 %v600, 32
    %v603 = vpop.permute.xlu0 %602
    %v605 = vadd.f32 %v585, %v603
    %607 = vrot.lane.b32.xlu0 %v605, 96
    %v608 = vpop.permute.xlu0 %607
    %610 = vrot.lane.b32.xlu0 %v585, 32
    %v611 = vpop.permute.xlu0 %610
    %vm613 = vcmask 261120
    %v614 = vsel %vm613, %v608, %v611
    %615 = vst.msk [vmem:[#allocation7] sm:$0xff] %vm47, %v614
    // Predicated region
    $region18: #{tpu_custom_call.1} parent=1 // pred_check
      _
    $region19: #{tpu_custom_call.1} parent=1 // pred_check_branch
      %617 = sbr.rel (0) target = $region21
    $region20: #{tpu_custom_call.1} parent=1 // pred_region
      %s619 = ssub.s32 128, 128
      %620 = vsyncadd [#allocation4], %s619
      %s622 = sshll.u32 [#allocation7], 4
      %s623 = int_to_ptr.vmem [resolvable:$true] %s622
      %625 = dma.vmem_to_hbm [thread:$0]  %s623, 128, %s2, [#allocation4]
    $region21: #{tpu_custom_call.1} parent=1 // pred_fallthru
      _
    // Predicated region
    $region22: #{tpu_custom_call.1} parent=1 // pred_check
      _
    $region23: #{tpu_custom_call.1} parent=1 // pred_check_branch
      %627 = sbr.rel (0) target = $region25
    $region24: #{tpu_custom_call.1} parent=1 // pred_region
      %628 = dma.done [#allocation4], 128
    $region25: #{tpu_custom_call.1} parent=1 // pred_fallthru
      _
    %629 = vsyncpa [#allocation3], 1
    %630 = vsyncpa [#allocation6], 1
    %631 = vsyncpa [#allocation4], 1

</llo_original>
